<compile_context>
chip_gen: v7x
topology: tpu7x:2x2x1
jax: 0.10.0
libtpu: 0.0.40
codegen_flags: <defaults>
</compile_context>

<pallas_src>
import functools

import jax
import jax.numpy as jnp
from jax.experimental import pallas as pl
from jax.experimental.pallas import tpu as pltpu


def _round_up(n, m):
    return ((n + m - 1) // m) * m


def _ffn_kernel(x_ref, w1_ref, b1_ref, w2_ref, b2_ref, o_ref, acc_ref):
    # x_ref:  (tm, E_p)  in dtype   w1_ref: (E_p, tk) bf16   b1_ref: (1, tk) f32
    # w2_ref: (tk, E_p)  bf16       b2_ref: (1, E_p)  f32
    # o_ref:  (tm, E_p)  out dtype  acc_ref: (tm, E_p) f32 scratch (lives across k)
    k = pl.program_id(1)

    x_f32 = x_ref[...].astype(jnp.float32)

    @pl.when(k == 0)
    def _init():
        # Fold residual + output bias into the accumulator so the finalize
        # step is just a cast + store.
        acc_ref[...] = x_f32 + b2_ref[...]

    # First matmul chunk on the MXU (bf16 inputs, f32 accumulation).
    h = jnp.dot(x_f32.astype(jnp.bfloat16), w1_ref[...],
                preferred_element_type=jnp.float32)
    # Bias + ReLU in f32 on the VPU.
    h = jnp.maximum(h + b1_ref[...], 0.0)
    # TODO(synk): dropout is identity in eval mode; training-mode dropout would
    # use pltpu.prng_seed / pltpu.prng_random_bits for an in-kernel mask.

    # Second matmul chunk, accumulated in f32 across the d_ff chunks.
    acc_ref[...] += jnp.dot(h.astype(jnp.bfloat16), w2_ref[...],
                            preferred_element_type=jnp.float32)

    @pl.when(k == pl.num_programs(1) - 1)
    def _finalize():
        o_ref[...] = acc_ref[...].astype(o_ref.dtype)


@functools.partial(jax.jit, static_argnames=("tm", "tk"))
def positional_feed_forward(x, w1, b1, w2, b2, *, tm=256, tk=512):
    """x: (B, S, E); w1: (E, d_ff); b1: (d_ff,); w2: (d_ff, E); b2: (E,)."""
    B, S, E = x.shape
    d_ff = w1.shape[1]
    N = B * S

    # Lane-dense padding of the feature dims to multiples of 128.
    E_p = _round_up(E, 128)
    F_p0 = _round_up(d_ff, 128)

    # Effective tile sizes (shrink for small inputs, keep (8,128)-aligned).
    tm_eff = min(tm, _round_up(N, 8))
    tk_eff = min(tk, F_p0)
    F_p = _round_up(F_p0, tk_eff)
    N_p = _round_up(N, tm_eff)

    # Zero-pad operands.  Weights go to bf16 (MXU native); biases stay f32.
    x2d = jnp.pad(x.reshape(N, E), ((0, N_p - N), (0, E_p - E)))
    w1_p = jnp.pad(w1, ((0, E_p - E), (0, F_p - d_ff))).astype(jnp.bfloat16)
    b1_p = jnp.pad(b1, (0, F_p - d_ff)).reshape(1, F_p).astype(jnp.float32)
    w2_p = jnp.pad(w2, ((0, F_p - d_ff), (0, E_p - E))).astype(jnp.bfloat16)
    b2_p = jnp.pad(b2, (0, E_p - E)).reshape(1, E_p).astype(jnp.float32)

    grid = (N_p // tm_eff, F_p // tk_eff)

    flops = 2 * N * E * d_ff * 2  # two matmuls
    bytes_accessed = (
        N * E * x.dtype.itemsize       # x in
        + N * E * x.dtype.itemsize     # out
        + E * d_ff * 2                 # W1 (bf16)
        + d_ff * E * 2                 # W2 (bf16)
        + d_ff * 4 + E * 4             # biases
    )

    out2d = pl.pallas_call(
        _ffn_kernel,
        out_shape=jax.ShapeDtypeStruct((N_p, E_p), x.dtype),
        grid_spec=pltpu.PrefetchScalarGridSpec(
            num_scalar_prefetch=0,
            grid=grid,
            in_specs=[
                pl.BlockSpec((tm_eff, E_p), lambda i, k: (i, 0)),   # x row tile
                pl.BlockSpec((E_p, tk_eff), lambda i, k: (0, k)),   # W1 chunk
                pl.BlockSpec((1, tk_eff), lambda i, k: (0, k)),     # b1 chunk
                pl.BlockSpec((tk_eff, E_p), lambda i, k: (k, 0)),   # W2 chunk
                pl.BlockSpec((1, E_p), lambda i, k: (0, 0)),        # b2
            ],
            out_specs=pl.BlockSpec((tm_eff, E_p), lambda i, k: (i, 0)),
            scratch_shapes=[pltpu.VMEM((tm_eff, E_p), jnp.float32)],
        ),
        compiler_params=pltpu.CompilerParams(
            dimension_semantics=("parallel", "arbitrary"),
            vmem_limit_bytes=48 * 1024 * 1024,
        ),
        cost_estimate=pl.CostEstimate(
            flops=flops, transcendentals=0, bytes_accessed=bytes_accessed
        ),
    )(x2d, w1_p, b1_p, w2_p, b2_p)

    return out2d[:N, :E].reshape(B, S, E)


if __name__ == "__main__":
    # Small shapes implied by the module: batch=2, seq=8, embed_dim=32, d_ff=64.
    B, S, E, d_ff = 2, 8, 32, 64

    key = jax.random.PRNGKey(0)
    k_x, k_w1, k_b1, k_w2, k_b2 = jax.random.split(key, 5)

    # Deterministic parameter init (PyTorch Linear-style uniform bounds).
    bound1 = 1.0 / (E ** 0.5)
    bound2 = 1.0 / (d_ff ** 0.5)
    x = jax.random.normal(k_x, (B, S, E), dtype=jnp.float32)
    w1 = jax.random.uniform(k_w1, (E, d_ff), jnp.float32, -bound1, bound1)
    b1 = jax.random.uniform(k_b1, (d_ff,), jnp.float32, -bound1, bound1)
    w2 = jax.random.uniform(k_w2, (d_ff, E), jnp.float32, -bound2, bound2)
    b2 = jax.random.uniform(k_b2, (E,), jnp.float32, -bound2, bound2)

    out = positional_feed_forward(x, w1, b1, w2, b2)
    jax.block_until_ready(out)

    # Pure-JAX reference with matching bf16-matmul / f32-accumulate math.
    def _ref(x, w1, b1, w2, b2):
        xr = x.reshape(-1, E)
        h = jnp.dot(xr.astype(jnp.bfloat16), w1.astype(jnp.bfloat16),
                    preferred_element_type=jnp.float32) + b1
        h = jnp.maximum(h, 0.0)
        y = jnp.dot(h.astype(jnp.bfloat16), w2.astype(jnp.bfloat16),
                    preferred_element_type=jnp.float32) + b2
        return y.reshape(x.shape) + x

    ref = _ref(x, w1, b1, w2, b2)
    assert out.shape == (B, S, E)
    assert jnp.allclose(out, ref, atol=1e-3, rtol=1e-3), "mismatch vs reference"

    print("KERNEL_OK")
</pallas_src>

<mosaic_0001>
module attributes {stable_mosaic.version = 11 : i64} {
  func.func @_ffn_kernel(%arg0: i32, %arg1: i32, %arg2: memref<16x128xf32, #tpu.memory_space<vmem>>, %arg3: memref<128x128xbf16, #tpu.memory_space<vmem>>, %arg4: memref<1x128xf32, #tpu.memory_space<vmem>>, %arg5: memref<128x128xbf16, #tpu.memory_space<vmem>>, %arg6: memref<1x128xf32, #tpu.memory_space<vmem>>, %arg7: memref<16x128xf32, #tpu.memory_space<vmem>>, %arg8: memref<16x128xf32, #tpu.memory_space<vmem>>) attributes {dimension_semantics = [#tpu.dimension_semantics<parallel>, #tpu.dimension_semantics<arbitrary>], iteration_bounds = array<i64: 1, 1>, scalar_prefetch = 0 : i64, scratch_operands = 1 : i64, tpu.core_type = #tpu.core_type<tc>, window_params = [{transform_indices = @transform_0, window_bounds = array<i64: 16, 128>}, {transform_indices = @transform_1, window_bounds = array<i64: 128, 128>}, {transform_indices = @transform_2, window_bounds = array<i64: 1, 128>}, {transform_indices = @transform_3, window_bounds = array<i64: 128, 128>}, {pipeline_mode = #tpu.pipeline_mode<synchronous>, transform_indices = @transform_4, window_bounds = array<i64: 1, 128>}, {transform_indices = @transform_5, window_bounds = array<i64: 16, 128>}]} {
    %c0 = arith.constant 0 : index
    %c0_0 = arith.constant 0 : index
    %0 = vector.load %arg2[%c0, %c0_0] : memref<16x128xf32, #tpu.memory_space<vmem>>, vector<16x128xf32>
    %c0_i32 = arith.constant 0 : i32
    %1 = arith.cmpi eq, %arg1, %c0_i32 : i32
    %2 = arith.extui %1 : i1 to i32
    %c0_i32_1 = arith.constant 0 : i32
    %3 = arith.cmpi ne, %2, %c0_i32_1 : i32
    scf.if %3 {
      %c0_16 = arith.constant 0 : index
      %c0_17 = arith.constant 0 : index
      %21 = vector.load %arg6[%c0_16, %c0_17] : memref<1x128xf32, #tpu.memory_space<vmem>>, vector<1x128xf32>
      %22 = vector.broadcast %21 : vector<1x128xf32> to vector<16x128xf32>
      %23 = arith.addf %0, %22 : vector<16x128xf32>
      %c0_18 = arith.constant 0 : index
      %c0_19 = arith.constant 0 : index
      %24 = vector.load %arg8[%c0_18, %c0_19] : memref<16x128xf32, #tpu.memory_space<vmem>>, vector<16x128xf32>
      tpu.vector_store %arg8[%c0_18, %c0_19], %23 {strides = array<i32>} : memref<16x128xf32, #tpu.memory_space<vmem>>, vector<16x128xf32>,
    } else {
    }
    %4 = arith.truncf %0 : vector<16x128xf32> to vector<16x128xbf16>
    %c0_2 = arith.constant 0 : index
    %c0_3 = arith.constant 0 : index
    %5 = vector.load %arg3[%c0_2, %c0_3] : memref<128x128xbf16, #tpu.memory_space<vmem>>, vector<128x128xbf16>
    %cst = arith.constant dense<0.000000e+00> : vector<16x128xf32>
    %6 = tpu.matmul %4, %5, %cst {dimension_numbers = #tpu.dot_dimension_numbers<[1], [0], [0], [1], [0, 0, 1, 1], [], []>} : vector<16x128xbf16>, vector<128x128xbf16>, vector<16x128xf32> -> vector<16x128xf32>
    %c0_4 = arith.constant 0 : index
    %c0_5 = arith.constant 0 : index
    %7 = vector.load %arg4[%c0_4, %c0_5] : memref<1x128xf32, #tpu.memory_space<vmem>>, vector<1x128xf32>
    %8 = vector.broadcast %7 : vector<1x128xf32> to vector<16x128xf32>
    %9 = arith.addf %6, %8 : vector<16x128xf32>
    %cst_6 = arith.constant 0.000000e+00 : f32
    %10 = vector.broadcast %cst_6 : f32 to vector<16x128xf32>
    %11 = arith.maximumf %9, %10 : vector<16x128xf32>
    %c0_7 = arith.constant 0 : index
    %c0_8 = arith.constant 0 : index
    %12 = vector.load %arg8[%c0_7, %c0_8] : memref<16x128xf32, #tpu.memory_space<vmem>>, vector<16x128xf32>
    %13 = arith.truncf %11 : vector<16x128xf32> to vector<16x128xbf16>
    %c0_9 = arith.constant 0 : index
    %c0_10 = arith.constant 0 : index
    %14 = vector.load %arg5[%c0_9, %c0_10] : memref<128x128xbf16, #tpu.memory_space<vmem>>, vector<128x128xbf16>
    %cst_11 = arith.constant dense<0.000000e+00> : vector<16x128xf32>
    %15 = tpu.matmul %13, %14, %cst_11 {dimension_numbers = #tpu.dot_dimension_numbers<[1], [0], [0], [1], [0, 0, 1, 1], [], []>} : vector<16x128xbf16>, vector<128x128xbf16>, vector<16x128xf32> -> vector<16x128xf32>
    %16 = arith.addf %12, %15 : vector<16x128xf32>
    %c0_12 = arith.constant 0 : index
    %c0_13 = arith.constant 0 : index
    %17 = vector.load %arg8[%c0_12, %c0_13] : memref<16x128xf32, #tpu.memory_space<vmem>>, vector<16x128xf32>
    tpu.vector_store %arg8[%c0_12, %c0_13], %16 {strides = array<i32>} : memref<16x128xf32, #tpu.memory_space<vmem>>, vector<16x128xf32>,
    %c0_i32_14 = arith.constant 0 : i32
    %18 = arith.cmpi eq, %arg1, %c0_i32_14 : i32
    %19 = arith.extui %18 : i1 to i32
    %c0_i32_15 = arith.constant 0 : i32
    %20 = arith.cmpi ne, %19, %c0_i32_15 : i32
    scf.if %20 {
      %c0_16 = arith.constant 0 : index
      %c0_17 = arith.constant 0 : index
      %21 = vector.load %arg8[%c0_16, %c0_17] : memref<16x128xf32, #tpu.memory_space<vmem>>, vector<16x128xf32>
      %c0_18 = arith.constant 0 : index
      %c0_19 = arith.constant 0 : index
      %22 = vector.load %arg7[%c0_18, %c0_19] : memref<16x128xf32, #tpu.memory_space<vmem>>, vector<16x128xf32>
      tpu.vector_store %arg7[%c0_18, %c0_19], %21 {strides = array<i32>} : memref<16x128xf32, #tpu.memory_space<vmem>>, vector<16x128xf32>,
    } else {
    }
    return
  }
  func.func @transform_0(%arg0: i32, %arg1: i32) -> (i32, i32) {
    %c0_i32 = arith.constant 0 : i32
    %c0_i32_0 = arith.constant 0 : i32
    return %arg0, %c0_i32 : i32, i32
  }
  func.func @transform_1(%arg0: i32, %arg1: i32) -> (i32, i32) {
    %c0_i32 = arith.constant 0 : i32
    %c0_i32_0 = arith.constant 0 : i32
    return %c0_i32, %arg1 : i32, i32
  }
  func.func @transform_2(%arg0: i32, %arg1: i32) -> (i32, i32) {
    %c0_i32 = arith.constant 0 : i32
    %c0_i32_0 = arith.constant 0 : i32
    return %c0_i32, %arg1 : i32, i32
  }
  func.func @transform_3(%arg0: i32, %arg1: i32) -> (i32, i32) {
    %c0_i32 = arith.constant 0 : i32
    %c0_i32_0 = arith.constant 0 : i32
    return %arg1, %c0_i32 : i32, i32
  }
  func.func @transform_4(%arg0: i32, %arg1: i32) -> (i32, i32) {
    %c0_i32 = arith.constant 0 : i32
    %c0_i32_0 = arith.constant 0 : i32
    %c0_i32_1 = arith.constant 0 : i32
    return %c0_i32, %c0_i32_0 : i32, i32
  }
  func.func @transform_5(%arg0: i32, %arg1: i32) -> (i32, i32) {
    %c0_i32 = arith.constant 0 : i32
    %c0_i32_0 = arith.constant 0 : i32
    return %arg0, %c0_i32 : i32, i32
  }
}

</mosaic_0001>

<llo_original>
// kernel: positional_feed_forward.1
$region0: #{positional_feed_forward.1}
  #allocation0 [shape = 'u32[]', space=smem, size = 0x4, offset = 0x4, fixed_abs, tag = 'smem constant byte address 0x4 - core index']
  #allocation1 [shape = 'u32[144,128]{1,0:T(1,128)}', space=vmem, size = 0x12000, scoped, tag = 'internal scratch']
  #allocation2 [shape = 'f32[16,128]{1,0:T(8,128)}', space=vmem, size = 0x2000, scoped, tag = 'scratch operand']
  %s0 = inlined_call_operand.vmem [shape: f32[16,128], index: 0, kind: input, shape index: {}]
  %s1 = inlined_call_operand.vmem [shape: bf16[128,128], index: 1, kind: input, shape index: {}]
  %s2 = inlined_call_operand.vmem [shape: f32[1,128], index: 2, kind: input, shape index: {}]
  %s3 = inlined_call_operand.vmem [shape: bf16[128,128], index: 3, kind: input, shape index: {}]
  %s4 = inlined_call_operand.vmem [shape: f32[1,128], index: 4, kind: input, shape index: {}]
  %s5 = inlined_call_operand.vmem [shape: f32[16,128], index: 5, kind: output, shape index: {}]
  %s6 = sld [smem:[#allocation0]]
  $region38: #{positional_feed_forward.1} parent=0
    _
  %s8 = ssub.s32 1, %s6
  %s9 = scalar_select 0, %s8, %s6
  // Predicated region
  $region2: #{positional_feed_forward.1} parent=0 // pred_check
    _
  $region3: #{positional_feed_forward.1} parent=0 // pred_check_branch
    %11 = sbr.rel (0) target = $region5
  $region4: #{positional_feed_forward.1} parent=0 // pred_region
    _
  $region5: #{positional_feed_forward.1} parent=0 // pred_fallthru
    _
  // Predicated region
  $region6: #{positional_feed_forward.1} parent=0 // pred_check
    _
  $region7: #{positional_feed_forward.1} parent=0 // pred_check_branch
    %13 = sbr.rel (0) target = $region9
  $region8: #{positional_feed_forward.1} parent=0 // pred_region
    _
  $region9: #{positional_feed_forward.1} parent=0 // pred_fallthru
    _
  // Predicated region
  $region10: #{positional_feed_forward.1} parent=0 // pred_check
    _
  $region11: #{positional_feed_forward.1} parent=0 // pred_check_branch
    %15 = sbr.rel (0) target = $region13
  $region12: #{positional_feed_forward.1} parent=0 // pred_region
    _
  $region13: #{positional_feed_forward.1} parent=0 // pred_fallthru
    _
  // Predicated region
  $region14: #{positional_feed_forward.1} parent=0 // pred_check
    _
  $region15: #{positional_feed_forward.1} parent=0 // pred_check_branch
    %17 = sbr.rel (0) target = $region17
  $region16: #{positional_feed_forward.1} parent=0 // pred_region
    _
  $region17: #{positional_feed_forward.1} parent=0 // pred_fallthru
    _
  // Predicated region
  $region18: #{positional_feed_forward.1} parent=0 // pred_check
    _
  $region19: #{positional_feed_forward.1} parent=0 // pred_check_branch
    %19 = sbr.rel (0) target = $region21
  $region20: #{positional_feed_forward.1} parent=0 // pred_region
    _
  $region21: #{positional_feed_forward.1} parent=0 // pred_fallthru
    _
  %v21 = vld [vmem:[%s0] sm:$0xff]
  %v22 = vld [vmem:[%s0 + $0x8] sm:$0xff]
  %p23 = scmp.eq.s32.totalorder 0, 0
  // Predicated region
  $region22: #{positional_feed_forward.1} parent=0 // pred_check
    %p24 = pneg %p23
  $region23: #{positional_feed_forward.1} parent=0 // pred_check_branch
    %26 = sbr.rel (%p24) target = $region25
  $region24: #{positional_feed_forward.1} parent=0 // pred_region
    %v27 = vld [vmem:[%s4] sm:$0x1]
    %v29 = vlaneseq
    %v30 = vshrl.u32 %v29, 7
    %v31 = vsub.s32 0, %v30
    %v32 = vrot.slane %v27, %v31
    %v34 = vadd.f32 %v21, %v32
    %v35 = vadd.f32 %v22, %v32
    %36 = vst [vmem:[#allocation2] sm:$0xff] %v34
    %37 = vst [vmem:[#allocation2 + $0x8] sm:$0xff] %v35
  $region25: #{positional_feed_forward.1} parent=0 // pred_fallthru
    _
  %v38 = vpack.c.bf16 %v22, %v21
  %v39 = vld [vmem:[%s1] sm:$0xf]
  %v40 = vld [vmem:[%s1 + $0x4] sm:$0xf]
  %v41 = vld [vmem:[%s1 + $0x8] sm:$0xf]
  %v42 = vld [vmem:[%s1 + $0xc] sm:$0xf]
  %v43 = vld [vmem:[%s1 + $0x10] sm:$0xf]
  %v44 = vld [vmem:[%s1 + $0x14] sm:$0xf]
  %v45 = vld [vmem:[%s1 + $0x18] sm:$0xf]
  %v46 = vld [vmem:[%s1 + $0x1c] sm:$0xf]
  %v47 = vld [vmem:[%s1 + $0x20] sm:$0xf]
  %v48 = vld [vmem:[%s1 + $0x24] sm:$0xf]
  %v49 = vld [vmem:[%s1 + $0x28] sm:$0xf]
  %v50 = vld [vmem:[%s1 + $0x2c] sm:$0xf]
  %v51 = vld [vmem:[%s1 + $0x30] sm:$0xf]
  %v52 = vld [vmem:[%s1 + $0x34] sm:$0xf]
  %v53 = vld [vmem:[%s1 + $0x38] sm:$0xf]
  %v54 = vld [vmem:[%s1 + $0x3c] sm:$0xf]
  %v55 = vld [vmem:[%s2] sm:$0x1]
  %v57 = vlaneseq
  %v58 = vshrl.u32 %v57, 7
  %v59 = vsub.s32 0, %v58
  %v60 = vrot.slane %v55, %v59
  %v78 = vunpack.c.l.b16 %v39
  %v79 = vunpack.c.l.b16 %v40
  %v80 = vunpack.c.l.b16 %v41
  %v81 = vunpack.c.l.b16 %v42
  %v82 = vunpack.c.l.b16 %v43
  %v83 = vunpack.c.l.b16 %v44
  %v84 = vunpack.c.l.b16 %v45
  %v85 = vunpack.c.l.b16 %v46
  %v86 = vunpack.c.l.b16 %v47
  %v87 = vunpack.c.l.b16 %v48
  %v88 = vunpack.c.l.b16 %v49
  %v89 = vunpack.c.l.b16 %v50
  %v90 = vunpack.c.l.b16 %v51
  %v91 = vunpack.c.l.b16 %v52
  %v92 = vunpack.c.l.b16 %v53
  %v93 = vunpack.c.l.b16 %v54
  %v94 = vpack.c.b16 %v79, %v78
  %v95 = vpack.c.b16 %v81, %v80
  %v96 = vpack.c.b16 %v83, %v82
  %v97 = vpack.c.b16 %v85, %v84
  %v98 = vpack.c.b16 %v87, %v86
  %v99 = vpack.c.b16 %v89, %v88
  %v100 = vpack.c.b16 %v91, %v90
  %v101 = vpack.c.b16 %v93, %v92
  %110 = vmatprep.subr.bf16.mxu0 0
  %111 = vmatpush1.bf16.msra.mxu0 %v94
  %112 = vmatprep.subr.bf16.mxu0 0
  %113 = vmatpush1.bf16.msra.mxu0 %v95
  %114 = vmatprep.subr.bf16.mxu0 0
  %115 = vmatpush1.bf16.msra.mxu0 %v96
  %116 = vmatprep.subr.bf16.mxu0 0
  %117 = vmatpush1.bf16.msra.mxu0 %v97
  %118 = vmatprep.subr.bf16.mxu0 0
  %119 = vmatpush1.bf16.msra.mxu0 %v98
  %120 = vmatprep.subr.bf16.mxu0 0
  %121 = vmatpush1.bf16.msra.mxu0 %v99
  %122 = vmatprep.subr.bf16.mxu0 0
  %123 = vmatpush1.bf16.msra.mxu0 %v100
  %124 = vmatprep.subr.bf16.mxu0 0
  %125 = vmatpush1.bf16.msra.mxu0 %v101
  %126 = vmatprep.subr.bf16.mxu0 0
  %127 = vmatpush1.bf16.msra.mxu0 0
  %128 = vmatprep.subr.bf16.mxu0 0
  %129 = vmatpush1.bf16.msra.mxu0 0
  %130 = vmatprep.subr.bf16.mxu0 0
  %131 = vmatpush1.bf16.msra.mxu0 0
  %132 = vmatprep.subr.bf16.mxu0 0
  %133 = vmatpush1.bf16.msra.mxu0 0
  %134 = vmatprep.subr.bf16.mxu0 0
  %135 = vmatpush1.bf16.msra.mxu0 0
  %136 = vmatprep.subr.bf16.mxu0 0
  %137 = vmatpush1.bf16.msra.mxu0 0
  %138 = vmatprep.subr.bf16.mxu0 0
  %139 = vmatpush1.bf16.msra.mxu0 0
  %140 = vmatprep.subr.bf16.mxu0 0
  %141 = vmatpush1.bf16.msra.mxu0 0
  %142 = vmatprep.mubr.bf16.mxu0 0
  %143 = vmatmul.mubr.bf16.gmra.mrb[0].mxu0 %v38
  %v144 = vpop.f32.mrb[0].mxu0
  %v145 = vadd.f32 %v60, %v144
  %v146 = vpop.f32.mrb[0].mxu0
  %v147 = vpop.f32.mrb[0].mxu0
  %v148 = vadd.f32 %v60, %v147
  %v149 = vpop.f32.mrb[0].mxu0
  %150 = vdwg.mxu0
  %v151 = vmax.f32 %v145, 0.0
  %v152 = vmax.f32 %v148, 0.0
  %v153 = vld [vmem:[#allocation2] sm:$0xff]
  %v154 = vld [vmem:[#allocation2 + $0x8] sm:$0xff]
  %v155 = vpack.c.bf16 %v152, %v151
  %v156 = vld [vmem:[%s3] sm:$0xf]
  %v157 = vld [vmem:[%s3 + $0x4] sm:$0xf]
  %v158 = vld [vmem:[%s3 + $0x8] sm:$0xf]
  %v159 = vld [vmem:[%s3 + $0xc] sm:$0xf]
  %v160 = vld [vmem:[%s3 + $0x10] sm:$0xf]
  %v161 = vld [vmem:[%s3 + $0x14] sm:$0xf]
  %v162 = vld [vmem:[%s3 + $0x18] sm:$0xf]
  %v163 = vld [vmem:[%s3 + $0x1c] sm:$0xf]
  %v164 = vld [vmem:[%s3 + $0x20] sm:$0xf]
  %v165 = vld [vmem:[%s3 + $0x24] sm:$0xf]
  %v166 = vld [vmem:[%s3 + $0x28] sm:$0xf]
  %v167 = vld [vmem:[%s3 + $0x2c] sm:$0xf]
  %v168 = vld [vmem:[%s3 + $0x30] sm:$0xf]
  %v169 = vld [vmem:[%s3 + $0x34] sm:$0xf]
  %v170 = vld [vmem:[%s3 + $0x38] sm:$0xf]
  %v171 = vld [vmem:[%s3 + $0x3c] sm:$0xf]
  %v188 = vunpack.c.l.b16 %v156
  %v189 = vunpack.c.l.b16 %v157
  %v190 = vunpack.c.l.b16 %v158
  %v191 = vunpack.c.l.b16 %v159
  %v192 = vunpack.c.l.b16 %v160
  %v193 = vunpack.c.l.b16 %v161
  %v194 = vunpack.c.l.b16 %v162
  %v195 = vunpack.c.l.b16 %v163
  %v196 = vunpack.c.l.b16 %v164
  %v197 = vunpack.c.l.b16 %v165
  %v198 = vunpack.c.l.b16 %v166
  %v199 = vunpack.c.l.b16 %v167
  %v200 = vunpack.c.l.b16 %v168
  %v201 = vunpack.c.l.b16 %v169
  %v202 = vunpack.c.l.b16 %v170
  %v203 = vunpack.c.l.b16 %v171
  %v204 = vpack.c.b16 %v189, %v188
  %v205 = vpack.c.b16 %v191, %v190
  %v206 = vpack.c.b16 %v193, %v192
  %v207 = vpack.c.b16 %v195, %v194
  %v208 = vpack.c.b16 %v197, %v196
  %v209 = vpack.c.b16 %v199, %v198
  %v210 = vpack.c.b16 %v201, %v200
  %v211 = vpack.c.b16 %v203, %v202
  %220 = vmatprep.subr.bf16.mxu0 0
  %221 = vmatpush1.bf16.msra.mxu0 %v204
  %222 = vmatprep.subr.bf16.mxu0 0
  %223 = vmatpush1.bf16.msra.mxu0 %v205
  %224 = vmatprep.subr.bf16.mxu0 0
  %225 = vmatpush1.bf16.msra.mxu0 %v206
  %226 = vmatprep.subr.bf16.mxu0 0
  %227 = vmatpush1.bf16.msra.mxu0 %v207
  %228 = vmatprep.subr.bf16.mxu0 0
  %229 = vmatpush1.bf16.msra.mxu0 %v208
  %230 = vmatprep.subr.bf16.mxu0 0
  %231 = vmatpush1.bf16.msra.mxu0 %v209
  %232 = vmatprep.subr.bf16.mxu0 0
  %233 = vmatpush1.bf16.msra.mxu0 %v210
  %234 = vmatprep.subr.bf16.mxu0 0
  %235 = vmatpush1.bf16.msra.mxu0 %v211
  %236 = vmatprep.subr.bf16.mxu0 0
  %237 = vmatpush1.bf16.msra.mxu0 0
  %238 = vmatprep.subr.bf16.mxu0 0
  %239 = vmatpush1.bf16.msra.mxu0 0
  %240 = vmatprep.subr.bf16.mxu0 0
  %241 = vmatpush1.bf16.msra.mxu0 0
  %242 = vmatprep.subr.bf16.mxu0 0
  %243 = vmatpush1.bf16.msra.mxu0 0
  %244 = vmatprep.subr.bf16.mxu0 0
  %245 = vmatpush1.bf16.msra.mxu0 0
  %246 = vmatprep.subr.bf16.mxu0 0
  %247 = vmatpush1.bf16.msra.mxu0 0
  %248 = vmatprep.subr.bf16.mxu0 0
  %249 = vmatpush1.bf16.msra.mxu0 0
  %250 = vmatprep.subr.bf16.mxu0 0
  %251 = vmatpush1.bf16.msra.mxu0 0
  %252 = vmatprep.mubr.bf16.mxu0 0
  %253 = vmatmul.mubr.bf16.gmra.mrb[0].mxu0 %v155
  %v254 = vpop.f32.mrb[0].mxu0
  %v255 = vadd.f32 0.0, %v254
  %v256 = vpop.f32.mrb[0].mxu0
  %v257 = vpop.f32.mrb[0].mxu0
  %v258 = vadd.f32 0.0, %v257
  %v259 = vpop.f32.mrb[0].mxu0
  %260 = vdwg.mxu0
  %v261 = vadd.f32 %v153, %v255
  %v262 = vadd.f32 %v154, %v258
  %263 = vst [vmem:[#allocation2] sm:$0xff] %v261
  %264 = vst [vmem:[#allocation2 + $0x8] sm:$0xff] %v262
  // Predicated region
  $region26: #{positional_feed_forward.1} parent=0 // pred_check
    %p265 = pneg %p23
  $region27: #{positional_feed_forward.1} parent=0 // pred_check_branch
    %267 = sbr.rel (%p265) target = $region29
  $region28: #{positional_feed_forward.1} parent=0 // pred_region
    %v268 = vld [vmem:[#allocation2] sm:$0xff]
    %v269 = vld [vmem:[#allocation2 + $0x8] sm:$0xff]
    %270 = vst [vmem:[%s5] sm:$0xff] %v268
    %271 = vst [vmem:[%s5 + $0x8] sm:$0xff] %v269
  $region29: #{positional_feed_forward.1} parent=0 // pred_fallthru
    _
  // Predicated region
  $region30: #{positional_feed_forward.1} parent=0 // pred_check
    _
  $region31: #{positional_feed_forward.1} parent=0 // pred_check_branch
    %273 = sbr.rel (0) target = $region33
  $region32: #{positional_feed_forward.1} parent=0 // pred_region
    _
  $region33: #{positional_feed_forward.1} parent=0 // pred_fallthru
    _
  // Predicated region
  $region34: #{positional_feed_forward.1} parent=0 // pred_check
    _
  $region35: #{positional_feed_forward.1} parent=0 // pred_check_branch
    %275 = sbr.rel (0) target = $region37
  $region36: #{positional_feed_forward.1} parent=0 // pred_region
    _
  $region37: #{positional_feed_forward.1} parent=0 // pred_fallthru
    _

</llo_original>
